<compile_context>
chip_gen: v6e
topology: v6e:2x2x1
jax: 0.10.0
libtpu: 0.0.40
codegen_flags: <defaults>
</compile_context>

<pallas_src>
import jax
import jax.numpy as jnp
from jax.experimental import pallas as pl
from jax.experimental.pallas import tpu as pltpu


def _round_up(x, m):
    return ((x + m - 1) // m) * m


def _make_bernoulli_kernel(lane_dense_out):
    def kernel(x_ref, *refs):
        """Fused MLP: x -> [Linear -> ELU]* -> Linear -> clamp(-10, 10)."""
        *param_refs, o_ref = refs
        n_layers = len(param_refs) // 2

        h = x_ref[...].astype(jnp.float32)
        for l in range(n_layers):
            w = param_refs[2 * l][...].astype(jnp.float32)       # (in, out), resident
            b = param_refs[2 * l + 1][...].astype(jnp.float32)   # (1, out),  resident
            h = jnp.dot(h, w, preferred_element_type=jnp.float32) + b
            if l < n_layers - 1:
                # ELU(alpha=1): x if x > 0 else exp(x) - 1 (clamp the exp arg
                # so the unselected branch never overflows).
                h = jnp.where(h > 0, h, jnp.exp(jnp.minimum(h, 0.0)) - 1.0)

        logits = jnp.clip(h, -10.0, 10.0)                         # (tile_n, 1)
        if lane_dense_out:
            # Lane-dense store: (tile_n, 1) -> (1, tile_n) via the idle XLU so
            # the write uses full 128-lane vregs (no masked vst.msk stores).
            o_ref[...] = logits.reshape(1, -1).astype(o_ref.dtype)
        else:
            o_ref[...] = logits.astype(o_ref.dtype)

    return kernel


def _choose_tile_n(n, d_in, requested):
    n_pad = max(8, _round_up(n, 8))
    if requested is not None:
        return min(max(8, _round_up(requested, 8)), n_pad)
    # Target a ~2 MiB streamed x tile so per-step pipeline overhead (~0.35 us)
    # is amortized against real HBM traffic; keep it a lane-friendly multiple.
    target_rows = (2 * 1024 * 1024) // max(1, d_in * 4)
    tile = max(1024, _round_up(target_rows, 128))
    # Keep >= 4 grid steps so ("parallel",) semantics can shard across the two
    # v7x TensorCores (and load-balance the partial tail).
    tile = min(tile, max(8, _round_up(-(-n // 4), 8)))
    return min(tile, n_pad)


def _vmem_limit_cap_bytes():
    """Per-generation ceiling for vmem_limit_bytes (leave compiler headroom)."""
    try:
        cap = int(pltpu.get_tpu_info().vmem_capacity_bytes)
    except Exception:
        cap = 64 * 1024 * 1024   # conservative: v7x has the smallest VMEM
    return max(16 * 1024 * 1024, (cap * 3) // 4)


def _build_pallas_call(x, flat_params, tile, num_tiles, lane_dense):
    n, d_in = x.shape
    bytes_f32 = 4

    in_specs = [pl.BlockSpec((tile, d_in), lambda i: (i, 0))]        # streamed x
    for a in flat_params:
        in_specs.append(pl.BlockSpec(a.shape, lambda i: (0, 0)))     # resident param

    if lane_dense:
        out_shape = jax.ShapeDtypeStruct((int(num_tiles), tile), x.dtype)
        out_specs = pl.BlockSpec((1, tile), lambda i: (i, 0))
    else:
        out_shape = jax.ShapeDtypeStruct((n, 1), x.dtype)
        out_specs = pl.BlockSpec((tile, 1), lambda i: (i, 0))

    # Scoped-VMEM estimate: double-buffered streamed x + output, the in-kernel
    # f32 copy of x, compiler-managed (tile, hidden) activation temporaries,
    # and the resident params (still double-buffered by the pipeline).
    widths = [d_in] + [a.shape[-1] for a in flat_params[0::2]]
    max_w = max(widths)
    est = 2 * tile * d_in * bytes_f32             # streamed x, double-buffered
    est += tile * d_in * bytes_f32                # f32 cast copy of x
    est += 4 * tile * max_w * bytes_f32           # activation temporaries (generous)
    est += 2 * tile * bytes_f32                   # output block, double-buffered
    est += 2 * sum(int(a.size) for a in flat_params) * bytes_f32
    est += 4 << 20                                # headroom

    cp_kwargs = dict(dimension_semantics=("parallel",))
    if est > 12 * 1024 * 1024:
        cp_kwargs["vmem_limit_bytes"] = int(min(2 * est, _vmem_limit_cap_bytes()))

    return pl.pallas_call(
        _make_bernoulli_kernel(lane_dense),
        out_shape=out_shape,
        grid_spec=pltpu.PrefetchScalarGridSpec(
            num_scalar_prefetch=0,
            grid=(int(num_tiles),),
            in_specs=in_specs,
            out_specs=out_specs,
        ),
        compiler_params=pltpu.CompilerParams(**cp_kwargs),
    )


def bernoulli_net_forward(x, params, *, tile_n=None):
    """BernoulliNet.forward.

    x:      [N, sizes[0]] float32
    params: list of (W [in, out], b [out]) for FullyConnected(sizes + [1]);
            the last layer has out == 1.
    tile_n: optional row-tile override (auto-sized for bandwidth if None).
    Returns (logits,) with logits of shape [N], clamped to [-10, 10].
    """
    n, d_in = x.shape
    tile = _choose_tile_n(n, d_in, tile_n)
    num_tiles = pl.cdiv(n, tile)

    flat = []
    for (w, b) in params:
        flat.extend([w, b.reshape(1, -1)])   # bias as (1, out): sublane-broadcasts

    # Primary: lane-dense (1, tile) output blocks (biggest measured Pallas
    # lever).  Fallback: (tile, 1) column output (identical math) if the
    # lane-dense store fails to lower/run on the local Mosaic version.
    try:
        out = _build_pallas_call(x, flat, tile, num_tiles, True)(x, *flat)
        out = jax.block_until_ready(out)
        logits = out.reshape(-1)[:n]                 # drop tail-tile padding
    except Exception:
        out = _build_pallas_call(x, flat, tile, num_tiles, False)(x, *flat)
        logits = out[:, 0]                           # .squeeze(-1)
    return (logits,)


def init_bernoulli_net_params(key, sizes):
    """Mirror FullyConnected(sizes + [1]) parameter shapes (nn.Linear init)."""
    fc_sizes = list(sizes) + [1]
    params = []
    for in_s, out_s in zip(fc_sizes[:-1], fc_sizes[1:]):
        key, kw, kb = jax.random.split(key, 3)
        bound = 1.0 / (in_s ** 0.5)
        w = jax.random.uniform(kw, (in_s, out_s), jnp.float32, -bound, bound)
        b = jax.random.uniform(kb, (out_s,), jnp.float32, -bound, bound)
        params.append((w, b))
    return params, key


def bernoulli_net_ref(x, params):
    """Pure-JAX reference for the same forward pass."""
    h = x
    for l, (w, b) in enumerate(params):
        h = h @ w + b[None, :]
        if l < len(params) - 1:
            h = jnp.where(h > 0, h, jnp.exp(jnp.minimum(h, 0.0)) - 1.0)
    return jnp.clip(h[:, 0], -10.0, 10.0)


# TODO(synk): make_dist (torch.distributions.Bernoulli construction / sampling)
# has no Pallas equivalent here; only the deterministic forward() is implemented.

if __name__ == "__main__":
    key = jax.random.PRNGKey(0)

    # BernoulliNet([32, 64]) -> FullyConnected([32, 64, 1])
    sizes = [32, 64]
    batch = 100   # deliberately NOT a multiple of the tile to exercise the tail

    params, key = init_bernoulli_net_params(key, sizes)
    key, kx = jax.random.split(key)
    x = jax.random.normal(kx, (batch, sizes[0]), dtype=jnp.float32) * 2.0

    ref = bernoulli_net_ref(x, params)

    # 1) Auto-tiled path (multi-step grid + partial tail tile at this batch).
    (logits,) = bernoulli_net_forward(x, params)
    logits = jax.block_until_ready(logits)
    assert logits.shape == (batch,)
    assert bool(jnp.all(logits <= 10.0)) and bool(jnp.all(logits >= -10.0))
    assert jnp.allclose(logits, ref, atol=1e-4, rtol=1e-4)

    # 2) Explicit large tile: single-step grid where the tile overhangs the batch.
    (logits2,) = bernoulli_net_forward(x, params, tile_n=128)
    logits2 = jax.block_until_ready(logits2)
    assert jnp.allclose(logits2, ref, atol=1e-4, rtol=1e-4)

    print("KERNEL_OK")
</pallas_src>

<mosaic_0001>
module attributes {stable_mosaic.version = 11 : i64} {
  func.func @kernel(%arg0: i32, %arg1: memref<32x32xf32, #tpu.memory_space<vmem>>, %arg2: memref<32x64xf32, #tpu.memory_space<vmem>>, %arg3: memref<1x64xf32, #tpu.memory_space<vmem>>, %arg4: memref<64x1xf32, #tpu.memory_space<vmem>>, %arg5: memref<1x1xf32, #tpu.memory_space<vmem>>, %arg6: memref<32x1xf32, #tpu.memory_space<vmem>>) attributes {dimension_semantics = [#tpu.dimension_semantics<parallel>], iteration_bounds = array<i64: 4>, scalar_prefetch = 0 : i64, scratch_operands = 0 : i64, tpu.core_type = #tpu.core_type<tc>, window_params = [{transform_indices = @transform_0, window_bounds = array<i64: 32, 32>}, {pipeline_mode = #tpu.pipeline_mode<synchronous>, transform_indices = @transform_1, window_bounds = array<i64: 32, 64>}, {pipeline_mode = #tpu.pipeline_mode<synchronous>, transform_indices = @transform_2, window_bounds = array<i64: 1, 64>}, {pipeline_mode = #tpu.pipeline_mode<synchronous>, transform_indices = @transform_3, window_bounds = array<i64: 64, 1>}, {pipeline_mode = #tpu.pipeline_mode<synchronous>, transform_indices = @transform_4, window_bounds = array<i64: 1, 1>}, {transform_indices = @transform_5, window_bounds = array<i64: 32, 1>}]} {
    %c0 = arith.constant 0 : index
    %c0_0 = arith.constant 0 : index
    %0 = vector.load %arg1[%c0, %c0_0] : memref<32x32xf32, #tpu.memory_space<vmem>>, vector<32x32xf32>
    %c0_1 = arith.constant 0 : index
    %c0_2 = arith.constant 0 : index
    %1 = vector.load %arg2[%c0_1, %c0_2] : memref<32x64xf32, #tpu.memory_space<vmem>>, vector<32x64xf32>
    %c0_3 = arith.constant 0 : index
    %c0_4 = arith.constant 0 : index
    %2 = vector.load %arg3[%c0_3, %c0_4] : memref<1x64xf32, #tpu.memory_space<vmem>>, vector<1x64xf32>
    %cst = arith.constant dense<0.000000e+00> : vector<32x64xf32>
    %3 = tpu.matmul %0, %1, %cst {dimension_numbers = #tpu.dot_dimension_numbers<[1], [0], [0], [1], [0, 0, 1, 1], [], []>} : vector<32x32xf32>, vector<32x64xf32>, vector<32x64xf32> -> vector<32x64xf32>
    %4 = vector.broadcast %2 : vector<1x64xf32> to vector<32x64xf32>
    %5 = arith.addf %3, %4 : vector<32x64xf32>
    %cst_5 = arith.constant 0.000000e+00 : f32
    %6 = vector.broadcast %cst_5 : f32 to vector<32x64xf32>
    %7 = arith.cmpf ogt, %5, %6 : vector<32x64xf32>
    %cst_6 = arith.constant 0.000000e+00 : f32
    %8 = vector.broadcast %cst_6 : f32 to vector<32x64xf32>
    %9 = arith.minimumf %5, %8 : vector<32x64xf32>
    %10 = math.exp %9 : vector<32x64xf32>
    %cst_7 = arith.constant 1.000000e+00 : f32
    %11 = vector.broadcast %cst_7 : f32 to vector<32x64xf32>
    %12 = arith.subf %10, %11 : vector<32x64xf32>
    %13 = arith.select %7, %5, %12 : vector<32x64xi1>, vector<32x64xf32>
    %c0_8 = arith.constant 0 : index
    %c0_9 = arith.constant 0 : index
    %14 = vector.load %arg4[%c0_8, %c0_9] : memref<64x1xf32, #tpu.memory_space<vmem>>, vector<64x1xf32>
    %c0_10 = arith.constant 0 : index
    %c0_11 = arith.constant 0 : index
    %15 = vector.load %arg5[%c0_10, %c0_11] : memref<1x1xf32, #tpu.memory_space<vmem>>, vector<1x1xf32>
    %cst_12 = arith.constant dense<0.000000e+00> : vector<32x1xf32>
    %16 = tpu.matmul %13, %14, %cst_12 {dimension_numbers = #tpu.dot_dimension_numbers<[1], [0], [0], [1], [0, 0, 1, 1], [], []>} : vector<32x64xf32>, vector<64x1xf32>, vector<32x1xf32> -> vector<32x1xf32>
    %17 = vector.broadcast %15 : vector<1x1xf32> to vector<32x1xf32>
    %18 = arith.addf %16, %17 : vector<32x1xf32>
    %cst_13 = arith.constant -1.000000e+01 : f32
    %cst_14 = arith.constant 1.000000e+01 : f32
    %19 = vector.broadcast %cst_13 : f32 to vector<32x1xf32>
    %20 = arith.maximumf %19, %18 : vector<32x1xf32>
    %21 = vector.broadcast %cst_14 : f32 to vector<32x1xf32>
    %22 = arith.minimumf %21, %20 : vector<32x1xf32>
    %c0_15 = arith.constant 0 : index
    %c0_16 = arith.constant 0 : index
    %23 = vector.load %arg6[%c0_15, %c0_16] : memref<32x1xf32, #tpu.memory_space<vmem>>, vector<32x1xf32>
    tpu.vector_store %arg6[%c0_15, %c0_16], %22 {strides = array<i32>} : memref<32x1xf32, #tpu.memory_space<vmem>>, vector<32x1xf32>,
    return
  }
  func.func @transform_0(%arg0: i32) -> (i32, i32) {
    %c0_i32 = arith.constant 0 : i32
    %c0_i32_0 = arith.constant 0 : i32
    return %arg0, %c0_i32 : i32, i32
  }
  func.func @transform_1(%arg0: i32) -> (i32, i32) {
    %c0_i32 = arith.constant 0 : i32
    %c0_i32_0 = arith.constant 0 : i32
    %c0_i32_1 = arith.constant 0 : i32
    return %c0_i32, %c0_i32_0 : i32, i32
  }
  func.func @transform_2(%arg0: i32) -> (i32, i32) {
    %c0_i32 = arith.constant 0 : i32
    %c0_i32_0 = arith.constant 0 : i32
    %c0_i32_1 = arith.constant 0 : i32
    return %c0_i32, %c0_i32_0 : i32, i32
  }
  func.func @transform_3(%arg0: i32) -> (i32, i32) {
    %c0_i32 = arith.constant 0 : i32
    %c0_i32_0 = arith.constant 0 : i32
    %c0_i32_1 = arith.constant 0 : i32
    return %c0_i32, %c0_i32_0 : i32, i32
  }
  func.func @transform_4(%arg0: i32) -> (i32, i32) {
    %c0_i32 = arith.constant 0 : i32
    %c0_i32_0 = arith.constant 0 : i32
    %c0_i32_1 = arith.constant 0 : i32
    return %c0_i32, %c0_i32_0 : i32, i32
  }
  func.func @transform_5(%arg0: i32) -> (i32, i32) {
    %c0_i32 = arith.constant 0 : i32
    %c0_i32_0 = arith.constant 0 : i32
    return %arg0, %c0_i32 : i32, i32
  }
}

</mosaic_0001>

<llo_original>
// kernel: tpu_custom_call.1
$region0: #{tpu_custom_call.1}
  #allocation0 [shape = 'u32[]', space=smem, size = 0x4, offset = 0x4, fixed_abs, tag = 'smem constant byte address 0x4 - core index']
  #allocation1 [shape = 'u32[144,128]{1,0:T(1,128)}', space=vmem, size = 0x12000, scoped, tag = 'internal scratch']
  #allocation2 [shape = 'f32[1,1]{1,0:T(1,128)S(1)}', space=vmem, size = 0x200, scoped, tag = 'scoped memory for tpu_custom_call.1']
  %s0 = inlined_call_operand.vmem [shape: f32[100,32], index: 0, kind: input, shape index: {}]
  %s1 = inlined_call_operand.vmem [shape: f32[32,64], index: 1, kind: input, shape index: {}]
  %s2 = inlined_call_operand.vmem [shape: f32[1,64], index: 2, kind: input, shape index: {}]
  %s3 = inlined_call_operand.vmem [shape: f32[64,1], index: 3, kind: input, shape index: {}]
  %s4 = inlined_call_operand.<no memory space> [shape: f32[1,1], index: 4, kind: input, shape index: {}]
  %s5 = inlined_call_operand.vmem [shape: f32[100,1], index: 5, kind: output, shape index: {}]
  %s6 = sld [smem:[#allocation0]]
  $region101: #{tpu_custom_call.1} parent=0
    _
  %s8 = ssub.s32 1, %s6
  %s9 = scalar_select 0, %s8, %s6
  %v10 = vstv %s4
  %11 = vst [vmem:[#allocation2] sm:$0x1] %v10
  $region1: #{tpu_custom_call.1} parent=0
    #allocation3 [shape = 'u8[32768]{0}', space=vmem, size = 0x8000, scoped, tag = 'output window, operand 0']
    loop: start=0, step=1, limit=6
    $region2: #{tpu_custom_call.1} parent=1 // loop_pre_header
      _
    $region3: #{tpu_custom_call.1} parent=1 // loop_header
      %s13 = sphi 0, %s17
      %p14 = scmp.ge.s32.totalorder %s13, 6
      %s23 = sphi 0, %s25
      %s26 = sphi 0, %s23
      %s27 = sphi 0, %s26
      %s43 = sphi 0, %s27
      %s47 = sphi 0, %s47
      %s49 = sphi 0, %s47
      %s50 = sphi 0, %s49
      %s64 = sphi 0, %s50
      %s68 = sphi 0, %s68
      %s70 = sphi 0, %s68
      %s71 = sphi 0, %s70
      %s85 = sphi 0, %s71
      %s89 = sphi 0, %s89
      %s91 = sphi 0, %s89
      %s92 = sphi 0, %s91
      %s106 = sphi 0, %s92
      %s110 = sphi 0, %s110
      %s112 = sphi 0, %s110
      %s113 = sphi 0, %s112
      %s127 = sphi 0, %s113
      %s133 = sphi 0, %s135
      %s136 = sphi 0, %s133
      %s137 = sphi 0, %s136
      %s153 = sphi 0, %s137
    $region4: #{tpu_custom_call.1} parent=1 // loop_header_branch
      %16 = sbr.rel (%p14) target = $region8
    $region5: #{tpu_custom_call.1} parent=1 // loop_body
      %s18 = ssub.s32 %s13, 1
      %s19 = ssub.s32 %s13, 2
      %s20 = sadd.s32 %s13, 1
      %s21 = ssub.s32 %s13, %s20
      %p22 = scmp.eq.s32.totalorder %s21, 0
      %s24 = sadd.s32 %s23, 1
      %s25 = scalar_select %p22, %s23, %s24
      %p28 = pneg %p22
      %p29 = scmp.eq.s32.totalorder %s13, 3
      %p30 = por %p28, %p29
      %p31 = scmp.ne.s32.totalorder %s23, %s26
      %p32 = scmp.eq.s32.totalorder %s13, 0
      %p33 = por %p31, %p32
      %p34 = scmp.ne.s32.totalorder %s23, %s26
      %p35 = scmp.eq.s32.totalorder %s18, 3
      %p36 = por %p34, %p35
      %p37 = scmp.ne.s32.totalorder %s26, %s27
      %p38 = scmp.eq.s32.totalorder %s18, 0
      %p39 = por %p37, %p38
      %p40 = scmp.ne.s32.totalorder %s26, %s27
      %p41 = scmp.eq.s32.totalorder %s19, 3
      %p42 = por %p40, %p41
      %p44 = scmp.ne.s32.totalorder %s27, %s43
      %p45 = scmp.eq.s32.totalorder %s19, 0
      %p46 = por %p44, %p45
      %s48 = sadd.s32 %s47, 1
      %p51 = scmp.eq.s32.totalorder %s13, 3
      %p52 = scmp.ne.s32.totalorder %s47, %s49
      %p53 = scmp.eq.s32.totalorder %s13, 0
      %p54 = por %p52, %p53
      %p55 = scmp.ne.s32.totalorder %s47, %s49
      %p56 = scmp.eq.s32.totalorder %s18, 3
      %p57 = por %p55, %p56
      %p58 = scmp.ne.s32.totalorder %s49, %s50
      %p59 = scmp.eq.s32.totalorder %s18, 0
      %p60 = por %p58, %p59
      %p61 = scmp.ne.s32.totalorder %s49, %s50
      %p62 = scmp.eq.s32.totalorder %s19, 3
      %p63 = por %p61, %p62
      %p65 = scmp.ne.s32.totalorder %s50, %s64
      %p66 = scmp.eq.s32.totalorder %s19, 0
      %p67 = por %p65, %p66
      %s69 = sadd.s32 %s68, 1
      %p72 = scmp.eq.s32.totalorder %s13, 3
      %p73 = scmp.ne.s32.totalorder %s68, %s70
      %p74 = scmp.eq.s32.totalorder %s13, 0
      %p75 = por %p73, %p74
      %p76 = scmp.ne.s32.totalorder %s68, %s70
      %p77 = scmp.eq.s32.totalorder %s18, 3
      %p78 = por %p76, %p77
      %p79 = scmp.ne.s32.totalorder %s70, %s71
      %p80 = scmp.eq.s32.totalorder %s18, 0
      %p81 = por %p79, %p80
      %p82 = scmp.ne.s32.totalorder %s70, %s71
      %p83 = scmp.eq.s32.totalorder %s19, 3
      %p84 = por %p82, %p83
      %p86 = scmp.ne.s32.totalorder %s71, %s85
      %p87 = scmp.eq.s32.totalorder %s19, 0
      %p88 = por %p86, %p87
      %s90 = sadd.s32 %s89, 1
      %p93 = scmp.eq.s32.totalorder %s13, 3
      %p94 = scmp.ne.s32.totalorder %s89, %s91
      %p95 = scmp.eq.s32.totalorder %s13, 0
      %p96 = por %p94, %p95
      %p97 = scmp.ne.s32.totalorder %s89, %s91
      %p98 = scmp.eq.s32.totalorder %s18, 3
      %p99 = por %p97, %p98
      %p100 = scmp.ne.s32.totalorder %s91, %s92
      %p101 = scmp.eq.s32.totalorder %s18, 0
      %p102 = por %p100, %p101
      %p103 = scmp.ne.s32.totalorder %s91, %s92
      %p104 = scmp.eq.s32.totalorder %s19, 3
      %p105 = por %p103, %p104
      %p107 = scmp.ne.s32.totalorder %s92, %s106
      %p108 = scmp.eq.s32.totalorder %s19, 0
      %p109 = por %p107, %p108
      %s111 = sadd.s32 %s110, 1
      %p114 = scmp.eq.s32.totalorder %s13, 3
      %p115 = scmp.ne.s32.totalorder %s110, %s112
      %p116 = scmp.eq.s32.totalorder %s13, 0
      %p117 = por %p115, %p116
      %p118 = scmp.ne.s32.totalorder %s110, %s112
      %p119 = scmp.eq.s32.totalorder %s18, 3
      %p120 = por %p118, %p119
      %p121 = scmp.ne.s32.totalorder %s112, %s113
      %p122 = scmp.eq.s32.totalorder %s18, 0
      %p123 = por %p121, %p122
      %p124 = scmp.ne.s32.totalorder %s112, %s113
      %p125 = scmp.eq.s32.totalorder %s19, 3
      %p126 = por %p124, %p125
      %p128 = scmp.ne.s32.totalorder %s113, %s127
      %p129 = scmp.eq.s32.totalorder %s19, 0
      %p130 = por %p128, %p129
      %s131 = ssub.s32 %s13, %s20
      %p132 = scmp.eq.s32.totalorder %s131, 0
      %s134 = sadd.s32 %s133, 1
      %s135 = scalar_select %p132, %s133, %s134
      %p138 = pneg %p132
      %p139 = scmp.eq.s32.totalorder %s13, 3
      %p140 = por %p138, %p139
      %p141 = scmp.ne.s32.totalorder %s133, %s136
      %p142 = scmp.eq.s32.totalorder %s13, 0
      %p143 = por %p141, %p142
      %p144 = scmp.ne.s32.totalorder %s133, %s136
      %p145 = scmp.eq.s32.totalorder %s18, 3
      %p146 = por %p144, %p145
      %p147 = scmp.ne.s32.totalorder %s136, %s137
      %p148 = scmp.eq.s32.totalorder %s18, 0
      %p149 = por %p147, %p148
      %p150 = scmp.ne.s32.totalorder %s136, %s137
      %p151 = scmp.eq.s32.totalorder %s19, 3
      %p152 = por %p150, %p151
      %p154 = scmp.ne.s32.totalorder %s137, %s153
      %p155 = scmp.eq.s32.totalorder %s19, 0
      %p156 = por %p154, %p155
      %p157 = scmp.le.s32.totalorder 1, %s13
      %p158 = scmp.lt.s32.totalorder %s13, 5
      %p159 = pnand %p157, %p158
      %p160 = pneg %p159
      // Predicated region
      $region9: #{tpu_custom_call.1} parent=5 // pred_check
        _
      $region10: #{tpu_custom_call.1} parent=5 // pred_check_branch
        %162 = sbr.rel (%p159) target = $region12
      $region11: #{tpu_custom_call.1} parent=5 // pred_region
        %s163 = ssub.s32 %s13, 1
        // Predicated region
        $region13: #{tpu_custom_call.1} parent=11 // pred_check
          %p164 = pneg %p60
        $region14: #{tpu_custom_call.1} parent=11 // pred_check_branch
          %166 = sbr.rel (%p164) target = $region16
        $region15: #{tpu_custom_call.1} parent=11 // pred_region
          _
        $region16: #{tpu_custom_call.1} parent=11 // pred_fallthru
          _
        // Predicated region
        $region17: #{tpu_custom_call.1} parent=11 // pred_check
          %p167 = pneg %p81
        $region18: #{tpu_custom_call.1} parent=11 // pred_check_branch
          %169 = sbr.rel (%p167) target = $region20
        $region19: #{tpu_custom_call.1} parent=11 // pred_region
          _
        $region20: #{tpu_custom_call.1} parent=11 // pred_fallthru
          _
        // Predicated region
        $region21: #{tpu_custom_call.1} parent=11 // pred_check
          %p170 = pneg %p102
        $region22: #{tpu_custom_call.1} parent=11 // pred_check_branch
          %172 = sbr.rel (%p170) target = $region24
        $region23: #{tpu_custom_call.1} parent=11 // pred_region
          _
        $region24: #{tpu_custom_call.1} parent=11 // pred_fallthru
          _
        // Predicated region
        $region25: #{tpu_custom_call.1} parent=11 // pred_check
          %p173 = pneg %p123
        $region26: #{tpu_custom_call.1} parent=11 // pred_check_branch
          %175 = sbr.rel (%p173) target = $region28
        $region27: #{tpu_custom_call.1} parent=11 // pred_region
          _
        $region28: #{tpu_custom_call.1} parent=11 // pred_fallthru
          _
      $region12: #{tpu_custom_call.1} parent=5 // pred_fallthru
        _
      %p176 = scmp.lt.s32.totalorder %s13, 4
      // Predicated region
      $region29: #{tpu_custom_call.1} parent=5 // pred_check
        %p177 = pneg %p176
      $region30: #{tpu_custom_call.1} parent=5 // pred_check_branch
        %179 = sbr.rel (%p177) target = $region32
      $region31: #{tpu_custom_call.1} parent=5 // pred_region
        // Predicated region
        $region33: #{tpu_custom_call.1} parent=31 // pred_check
          %p180 = pneg %p33
        $region34: #{tpu_custom_call.1} parent=31 // pred_check_branch
          %182 = sbr.rel (%p180) target = $region36
        $region35: #{tpu_custom_call.1} parent=31 // pred_region
          %s183 = smul.u32 4, %s13
          %s184 = ssub.s32 13, %s183
          %p185 = scmp.lt.s32.totalorder %s184, 4
          %s186 = scalar_select %p185, %s184, 4
          %s187 = smul.u32 128, %s186
          %p188 = scmp.lt.s32.totalorder %s183, 12
          %s189 = scalar_select %p188, %s183, 12
          %s190 = smul.addr %s189, 8
          %s191 = scalar_lea.vmem %s0, %s190
          %s192 = smul.u32 4, %s13
          %s193 = ssub.s32 13, %s192
          %p194 = scmp.lt.s32.totalorder %s193, 4
          %s195 = scalar_select %p194, %s193, 4
          %s196 = smul.u32 128, %s195
        $region36: #{tpu_custom_call.1} parent=31 // pred_fallthru
          _
      $region32: #{tpu_custom_call.1} parent=5 // pred_fallthru
        _
      %p197 = scmp.le.s32.totalorder 1, %s13
      %p198 = scmp.lt.s32.totalorder %s13, 5
      %p199 = pnand %p197, %p198
      %p200 = pneg %p199
      // Predicated region
      $region37: #{tpu_custom_call.1} parent=5 // pred_check
        _
      $region38: #{tpu_custom_call.1} parent=5 // pred_check_branch
        %202 = sbr.rel (%p199) target = $region40
      $region39: #{tpu_custom_call.1} parent=5 // pred_region
        %s203 = ssub.s32 %s13, 1
        %s204 = smul.u32 4, %s18
        %s205 = ssub.s32 13, %s204
        %p206 = scmp.lt.s32.totalorder %s205, 4
        %s207 = scalar_select %p206, %s205, 4
        %s208 = smul.u32 128, %s207
        %p209 = scmp.lt.s32.totalorder %s204, 12
        %s210 = scalar_select %p209, %s204, 12
        %s211 = smul.addr %s210, 8
        %s212 = scalar_lea.vmem %s0, %s211
        %p213 = pneg %p39
        %p214 = pneg %p36
        %p215 = pneg %p60
        %p216 = pneg %p57
        %p217 = pneg %p81
        %p218 = pneg %p78
        %p219 = pneg %p102
        %p220 = pneg %p99
        %p221 = pneg %p123
        %p222 = pneg %p120
        %p223 = pneg %p149
        %p224 = pneg %p146
        %s225 = sand.u32 %s136, 1
        %s226 = sand.u32 %s136, 1
        %s227 = smul.addr %s226, 32
        %s228 = scalar_lea.vmem [#allocation3], %s227
        %s229 = smul.u32 4, %s18
        %s230 = ssub.s32 13, %s229
        %p231 = scmp.lt.s32.totalorder %s230, 4
        %s232 = scalar_select %p231, %s230, 4
        %s233 = smul.u32 128, %s232
        %p234 = scmp.lt.s32.totalorder %s229, 12
        %s235 = scalar_select %p234, %s229, 12
        %s236 = smul.addr %s235, 8
        %s237 = scalar_lea.vmem %s0, %s236
        %s238 = smul.u32 4, %s18
        %s239 = ssub.s32 13, %s238
        %p240 = scmp.lt.s32.totalorder %s239, 4
        %s241 = scalar_select %p240, %s239, 4
        %s242 = smul.u32 128, %s241
        %s243 = smul.u32 4, %s18
        %s244 = ssub.s32 13, %s243
        %p245 = scmp.lt.s32.totalorder %s244, 4
        %s246 = scalar_select %p245, %s244, 4
        %s247 = smul.u32 128, %s246
        %v248 = vld [vmem:[%s237] sm:$0xff]
        %v249 = vld [vmem:[%s237 + $0x8] sm:$0xff]
        %v250 = vld [vmem:[%s237 + $0x10] sm:$0xff]
        %v251 = vld [vmem:[%s237 + $0x18] sm:$0xff]
        %v252 = vld [vmem:[%s1] sm:$0xff]
        %v253 = vld [vmem:[%s1 + $0x8] sm:$0xff]
        %v254 = vld [vmem:[%s1 + $0x10] sm:$0xff]
        %v255 = vld [vmem:[%s1 + $0x18] sm:$0xff]
        %v256 = vld [vmem:[%s2] sm:$0x1]
        %v258 = vlaneseq
        %v259 = vshrl.u32 %v258, 7
        %v260 = vsub.s32 0, %v259
        %v261 = vrot.slane %v256, %v260
        %vm263 = vcmask 261120
        %v265 = vsel %vm263, %v248, 0
        %v268 = vsel %vm263, %v249, 0
        %v271 = vsel %vm263, %v250, 0
        %v274 = vsel %vm263, %v251, 0
        %276 = vmatprep.subr.mxu0 0.0
        %277 = vmatpush1.msra.mxu0 0.0
        %278 = vmatprep.subr.mxu0 0.0
        %279 = vmatpush1.msra.mxu0 0.0
        %280 = vmatprep.subr.mxu0 0.0
        %281 = vmatpush1.msra.mxu0 0.0
        %282 = vmatprep.subr.mxu0 0.0
        %283 = vmatpush1.msra.mxu0 0.0
        %284 = vmatprep.subr.mxu0 0.0
        %285 = vmatpush1.msra.mxu0 0.0
        %286 = vmatprep.subr.mxu0 0.0
        %287 = vmatpush1.msra.mxu0 0.0
        %288 = vmatprep.subr.mxu0 0.0
        %289 = vmatpush1.msra.mxu0 0.0
        %290 = vmatprep.subr.mxu0 0.0
        %291 = vmatpush1.msra.mxu0 0.0
        %292 = vmatprep.subr.mxu0 0.0
        %293 = vmatpush1.msra.mxu0 0.0
        %294 = vmatprep.subr.mxu0 0.0
        %295 = vmatpush1.msra.mxu0 0.0
        %296 = vmatprep.subr.mxu0 0.0
        %297 = vmatpush1.msra.mxu0 0.0
        %298 = vmatprep.subr.mxu0 0.0
        %299 = vmatpush1.msra.mxu0 0.0
        %300 = vmatprep.subr.mxu0 0.0
        %301 = vmatpush1.msra.mxu0 %v255
        %302 = vmatprep.subr.mxu0 0.0
        %303 = vmatpush1.msra.mxu0 %v254
        %304 = vmatprep.subr.mxu0 0.0
        %305 = vmatpush1.msra.mxu0 %v253
        %306 = vmatprep.subr.mxu0 0.0
        %307 = vmatpush1.msra.mxu0 %v252
        %308 = vmatprep.subr.mxu0 0.0
        %309 = vmatpush2.msra.mxu0 0.0
        %310 = vmatprep.subr.mxu0 0.0
        %311 = vmatpush2.msra.mxu0 0.0
        %312 = vmatprep.subr.mxu0 0.0
        %313 = vmatpush2.msra.mxu0 0.0
        %314 = vmatprep.subr.mxu0 0.0
        %315 = vmatpush2.msra.mxu0 0.0
        %316 = vmatprep.subr.mxu0 0.0
        %317 = vmatpush2.msra.mxu0 0.0
        %318 = vmatprep.subr.mxu0 0.0
        %319 = vmatpush2.msra.mxu0 0.0
        %320 = vmatprep.subr.mxu0 0.0
        %321 = vmatpush2.msra.mxu0 0.0
        %322 = vmatprep.subr.mxu0 0.0
        %323 = vmatpush2.msra.mxu0 0.0
        %324 = vmatprep.subr.mxu0 0.0
        %325 = vmatpush2.msra.mxu0 0.0
        %326 = vmatprep.subr.mxu0 0.0
        %327 = vmatpush2.msra.mxu0 0.0
        %328 = vmatprep.subr.mxu0 0.0
        %329 = vmatpush2.msra.mxu0 0.0
        %330 = vmatprep.subr.mxu0 0.0
        %331 = vmatpush2.msra.mxu0 0.0
        %332 = vmatprep.subr.mxu0 0.0
        %333 = vmatpush2.msra.mxu0 0.0
        %334 = vmatprep.subr.mxu0 0.0
        %335 = vmatpush2.msra.mxu0 0.0
        %336 = vmatprep.subr.mxu0 0.0
        %337 = vmatpush2.msra.mxu0 0.0
        %338 = vmatprep.subr.mxu0 0.0
        %339 = vmatpush2.msra.mxu0 0.0
        %340 = vmatprep.mubr.f32.mxu0 0.0
        %341 = vmatmul.mubr.f32.gmra.mxu0 %v265
        %v342 = vpop.f32.mrf.mxu0
        %v343 = vadd.f32 %v261, %v342
        %v344 = vpop.f32.mrf.mxu0
        %345 = vmatprep.mubr.f32.mxu0 0.0
        %346 = vmatmul.mubr.f32.gmra.mxu0 %v268
        %v347 = vpop.f32.mrf.mxu0
        %v348 = vadd.f32 %v261, %v347
        %v349 = vpop.f32.mrf.mxu0
        %350 = vmatprep.mubr.f32.mxu0 0.0
        %351 = vmatmul.mubr.f32.gmra.mxu0 %v271
        %v352 = vpop.f32.mrf.mxu0
        %v353 = vadd.f32 %v261, %v352
        %v354 = vpop.f32.mrf.mxu0
        %355 = vmatprep.mubr.f32.mxu0 0.0
        %356 = vmatmul.mubr.f32.gmra.mxu0 %v274
        %v357 = vpop.f32.mrf.mxu0
        %v358 = vadd.f32 %v261, %v357
        %v359 = vpop.f32.mrf.mxu0
        %360 = vdwg.mxu0
        %vm361 = vcmp.gt.f32.partialorder %v343, 0.0
        %vm362 = vcmp.gt.f32.partialorder %v348, 0.0
        %vm363 = vcmp.gt.f32.partialorder %v353, 0.0
        %vm364 = vcmp.gt.f32.partialorder %v358, 0.0
        %v365 = vmin.f32 %v343, 0.0
        %v366 = vmin.f32 %v348, 0.0
        %v367 = vmin.f32 %v353, 0.0
        %v368 = vmin.f32 %v358, 0.0
        %v369 = vmul.f32 %v365, 1.442695
        %v370 = vpow.pop %v369
        %v371 = vmul.f32 %v366, 1.442695
        %v372 = vpow.pop %v371
        %v373 = vmul.f32 %v367, 1.442695
        %v374 = vpow.pop %v373
        %v375 = vmul.f32 %v368, 1.442695
        %v376 = vpow.pop %v375
        %v377 = vsub.f32 %v370, 1.0
        %v378 = vsub.f32 %v372, 1.0
        %v379 = vsub.f32 %v374, 1.0
        %v380 = vsub.f32 %v376, 1.0
        %v381 = vsel %vm361, %v343, %v377
        %v382 = vsel %vm362, %v348, %v378
        %v383 = vsel %vm363, %v353, %v379
        %v384 = vsel %vm364, %v358, %v380
        %v385 = vld [vmem:[%s3] sm:$0xff]
        %v386 = vld [vmem:[%s3 + $0x8] sm:$0xff]
        %v387 = vld [vmem:[%s3 + $0x10] sm:$0xff]
        %v388 = vld [vmem:[%s3 + $0x18] sm:$0xff]
        %v389 = vld [vmem:[%s3 + $0x20] sm:$0xff]
        %v390 = vld [vmem:[%s3 + $0x28] sm:$0xff]
        %v391 = vld [vmem:[%s3 + $0x30] sm:$0xff]
        %v392 = vld [vmem:[%s3 + $0x38] sm:$0xff]
        %v393 = vld [vmem:[#allocation2] sm:$0x1]
        %v395 = vlaneseq
        %v396 = vshrl.u32 %v395, 7
        %v397 = vsub.s32 0, %v396
        %v398 = vrot.slane %v393, %v397
        %vm400 = vcmask 523264
        %v402 = vsel %vm400, %v381, 0
        %v405 = vsel %vm400, %v382, 0
        %v408 = vsel %vm400, %v383, 0
        %v411 = vsel %vm400, %v384, 0
        %413 = vmatprep.subr.mxu0 0.0
        %414 = vmatpush1.msra.mxu0 0.0
        %415 = vmatprep.subr.mxu0 0.0
        %416 = vmatpush1.msra.mxu0 0.0
        %417 = vmatprep.subr.mxu0 0.0
        %418 = vmatpush1.msra.mxu0 0.0
        %419 = vmatprep.subr.mxu0 0.0
        %420 = vmatpush1.msra.mxu0 0.0
        %421 = vmatprep.subr.mxu0 0.0
        %422 = vmatpush1.msra.mxu0 0.0
        %423 = vmatprep.subr.mxu0 0.0
        %424 = vmatpush1.msra.mxu0 0.0
        %425 = vmatprep.subr.mxu0 0.0
        %426 = vmatpush1.msra.mxu0 0.0
        %427 = vmatprep.subr.mxu0 0.0
        %428 = vmatpush1.msra.mxu0 0.0
        %429 = vmatprep.subr.mxu0 0.0
        %430 = vmatpush1.msra.mxu0 %v392
        %431 = vmatprep.subr.mxu0 0.0
        %432 = vmatpush1.msra.mxu0 %v391
        %433 = vmatprep.subr.mxu0 0.0
        %434 = vmatpush1.msra.mxu0 %v390
        %435 = vmatprep.subr.mxu0 0.0
        %436 = vmatpush1.msra.mxu0 %v389
        %437 = vmatprep.subr.mxu0 0.0
        %438 = vmatpush1.msra.mxu0 %v388
        %439 = vmatprep.subr.mxu0 0.0
        %440 = vmatpush1.msra.mxu0 %v387
        %441 = vmatprep.subr.mxu0 0.0
        %442 = vmatpush1.msra.mxu0 %v386
        %443 = vmatprep.subr.mxu0 0.0
        %444 = vmatpush1.msra.mxu0 %v385
        %445 = vmatprep.subr.mxu0 0.0
        %446 = vmatpush2.msra.mxu0 0.0
        %447 = vmatprep.subr.mxu0 0.0
        %448 = vmatpush2.msra.mxu0 0.0
        %449 = vmatprep.subr.mxu0 0.0
        %450 = vmatpush2.msra.mxu0 0.0
        %451 = vmatprep.subr.mxu0 0.0
        %452 = vmatpush2.msra.mxu0 0.0
        %453 = vmatprep.subr.mxu0 0.0
        %454 = vmatpush2.msra.mxu0 0.0
        %455 = vmatprep.subr.mxu0 0.0
        %456 = vmatpush2.msra.mxu0 0.0
        %457 = vmatprep.subr.mxu0 0.0
        %458 = vmatpush2.msra.mxu0 0.0
        %459 = vmatprep.subr.mxu0 0.0
        %460 = vmatpush2.msra.mxu0 0.0
        %461 = vmatprep.subr.mxu0 0.0
        %462 = vmatpush2.msra.mxu0 0.0
        %463 = vmatprep.subr.mxu0 0.0
        %464 = vmatpush2.msra.mxu0 0.0
        %465 = vmatprep.subr.mxu0 0.0
        %466 = vmatpush2.msra.mxu0 0.0
        %467 = vmatprep.subr.mxu0 0.0
        %468 = vmatpush2.msra.mxu0 0.0
        %469 = vmatprep.subr.mxu0 0.0
        %470 = vmatpush2.msra.mxu0 0.0
        %471 = vmatprep.subr.mxu0 0.0
        %472 = vmatpush2.msra.mxu0 0.0
        %473 = vmatprep.subr.mxu0 0.0
        %474 = vmatpush2.msra.mxu0 0.0
        %475 = vmatprep.subr.mxu0 0.0
        %476 = vmatpush2.msra.mxu0 0.0
        %477 = vmatprep.mubr.f32.mxu0 0.0
        %478 = vmatmul.mubr.f32.gmra.mxu0 %v402
        %v479 = vpop.f32.mrf.mxu0
        %v480 = vadd.f32 %v398, %v479
        %v481 = vpop.f32.mrf.mxu0
        %482 = vmatprep.mubr.f32.mxu0 0.0
        %483 = vmatmul.mubr.f32.gmra.mxu0 %v405
        %v484 = vpop.f32.mrf.mxu0
        %v485 = vadd.f32 %v398, %v484
        %v486 = vpop.f32.mrf.mxu0
        %487 = vmatprep.mubr.f32.mxu0 0.0
        %488 = vmatmul.mubr.f32.gmra.mxu0 %v408
        %v489 = vpop.f32.mrf.mxu0
        %v490 = vadd.f32 %v398, %v489
        %v491 = vpop.f32.mrf.mxu0
        %492 = vmatprep.mubr.f32.mxu0 0.0
        %493 = vmatmul.mubr.f32.gmra.mxu0 %v411
        %v494 = vpop.f32.mrf.mxu0
        %v495 = vadd.f32 %v398, %v494
        %v496 = vpop.f32.mrf.mxu0
        %497 = vdwg.mxu0
        %v498 = vmax.f32 %v480, -10.0
        %v499 = vmax.f32 %v485, -10.0
        %v500 = vmax.f32 %v490, -10.0
        %v501 = vmax.f32 %v495, -10.0
        %v502 = vmin.f32 %v498, 10.0
        %v503 = vmin.f32 %v499, 10.0
        %v504 = vmin.f32 %v500, 10.0
        %v505 = vmin.f32 %v501, 10.0
        %vm506 = vcmask 7168
        %507 = vst.msk [vmem:[%s228] sm:$0xff] %vm506, %v502
        %508 = vst.msk [vmem:[%s228 + $0x8] sm:$0xff] %vm506, %v503
        %509 = vst.msk [vmem:[%s228 + $0x10] sm:$0xff] %vm506, %v504
        %510 = vst.msk [vmem:[%s228 + $0x18] sm:$0xff] %vm506, %v505
        %s511 = sand.u32 %s136, 1
        %s512 = sand.u32 %s136, 1
        %s513 = smul.addr %s512, 32
        %s514 = scalar_lea.vmem [#allocation3], %s513
        // Predicated region
        $region41: #{tpu_custom_call.1} parent=39 // pred_check
          %p515 = pneg %p146
        $region42: #{tpu_custom_call.1} parent=39 // pred_check_branch
          %517 = sbr.rel (%p515) target = $region44
        $region43: #{tpu_custom_call.1} parent=39 // pred_region
          %s518 = smul.u32 4, %s18
          %s519 = ssub.s32 13, %s518
          %p520 = scmp.lt.s32.totalorder %s519, 4
          %s521 = scalar_select %p520, %s519, 4
          %s522 = smul.u32 128, %s521
          %p523 = scmp.ne.s32.totalorder 0, %s522
          %s524 = smul.addr %s518, 8
          %s525 = scalar_lea.vmem %s5, %s524
          // Predicated region
          $region45: #{tpu_custom_call.1} parent=43 // pred_check
            %p526 = pneg %p523
          $region46: #{tpu_custom_call.1} parent=43 // pred_check_branch
            %528 = sbr.rel (%p526) target = $region48
          $region47: #{tpu_custom_call.1} parent=43 // pred_region
            // Predicated region
            $region49: #{tpu_custom_call.1} parent=47 // pred_check
              _
            $region50: #{tpu_custom_call.1} parent=47 // pred_check_branch
              %530 = sbr.rel (0) target = $region52
            $region51: #{tpu_custom_call.1} parent=47 // pred_region
              // Predicated region
              $region71: #{tpu_custom_call.1} parent=51 // pred_check
                _
              $region72: #{tpu_custom_call.1} parent=51 // pred_check_branch
                %586 = sbr.rel (0) target = $region74
              $region73: #{tpu_custom_call.1} parent=51 // pred_region
                %s587 = sshrl.u32 %s521, 2
                // While loop
                $region75: #{tpu_custom_call.1} parent=73 // loop_pre_header
                  _
                $region76: #{tpu_custom_call.1} parent=73 // loop_header
                  %s589 = sphi 0, %s591
                  %p590 = scmp.ge.s32.totalorder %s589, %s587
                  %s594 = sphi 0, %s607
                  %s595 = sphi %s514, %s610
                  %s596 = sphi %s525, %s611
                $region77: #{tpu_custom_call.1} parent=73 // loop_header_branch
                  %593 = sbr.rel (%p590) target = $region81
                $region78: #{tpu_custom_call.1} parent=73 // loop_body
                  %v597 = vld [vmem:[%s595] sm:$0xff]
                  %598 = vst [vmem:[%s596] sm:$0xff] %v597
                  %v599 = vld [vmem:[%s595 + $0x8] sm:$0xff]
                  %600 = vst [vmem:[%s596 + $0x8] sm:$0xff] %v599
                  %v601 = vld [vmem:[%s595 + $0x10] sm:$0xff]
                  %602 = vst [vmem:[%s596 + $0x10] sm:$0xff] %v601
                  %v603 = vld [vmem:[%s595 + $0x18] sm:$0xff]
                  %604 = vst [vmem:[%s596 + $0x18] sm:$0xff] %v603
                  %s605 = sadd.s32 1, %s594
                  %p606 = scmp.ge.s32.totalorder %s605, %s587
                  %s607 = scalar_select %p606, 0, %s605
                  %s608 = smul.u32 %s607, 32
                  %s609 = smul.u32 %s607, 32
                  %s610 = scalar_lea.vmem %s514, %s608 [#allocation3]
                  %s611 = scalar_lea.vmem %s525, %s609
                $region79: #{tpu_custom_call.1} parent=73 // loop_footer
                  %s591 = sadd.s32 %s589, 1
                $region80: #{tpu_custom_call.1} parent=73 // loop_footer_branch
                  %588 = sbr.rel target = $region76
                $region81: #{tpu_custom_call.1} parent=73 // loop_exit
                  _
                %s612 = sshrl.u32 %s521, 2
                %s613 = sand.u32 %s521, 3
                %s614 = smul.u32 %s612, 4
                %s615 = smul.u32 8, %s614
                %s616 = scalar_lea.vmem %s514, %s615 [#allocation3]
                %s617 = smul.u32 8, %s614
                %s618 = scalar_lea.vmem %s525, %s617
                // While loop
                $region82: #{tpu_custom_call.1} parent=73 // loop_pre_header
                  _
                $region83: #{tpu_custom_call.1} parent=73 // loop_header
                  %s620 = sphi 0, %s622
                  %p621 = scmp.ge.s32.totalorder %s620, %s613
                  %s625 = sphi 0, %s632
                  %s626 = sphi %s616, %s635
                  %s627 = sphi %s618, %s636
                $region84: #{tpu_custom_call.1} parent=73 // loop_header_branch
                  %624 = sbr.rel (%p621) target = $region88
                $region85: #{tpu_custom_call.1} parent=73 // loop_body
                  %v628 = vld [vmem:[%s626] sm:$0xff]
                  %629 = vst [vmem:[%s627] sm:$0xff] %v628
                  %s630 = sadd.s32 1, %s625
                  %p631 = scmp.ge.s32.totalorder %s630, %s613
                  %s632 = scalar_select %p631, 0, %s630
                  %s633 = smul.u32 %s632, 8
                  %s634 = smul.u32 %s632, 8
                  %s635 = scalar_lea.vmem %s616, %s633 [#allocation3]
                  %s636 = scalar_lea.vmem %s618, %s634
                $region86: #{tpu_custom_call.1} parent=73 // loop_footer
                  %s622 = sadd.s32 %s620, 1
                $region87: #{tpu_custom_call.1} parent=73 // loop_footer_branch
                  %619 = sbr.rel target = $region83
                $region88: #{tpu_custom_call.1} parent=73 // loop_exit
                  _
              $region74: #{tpu_custom_call.1} parent=51 // pred_fallthru
                _
              // Predicated region
              $region89: #{tpu_custom_call.1} parent=51 // pred_check
                _
              $region90: #{tpu_custom_call.1} parent=51 // pred_check_branch
                %638 = sbr.rel target = $region92
              $region91: #{tpu_custom_call.1} parent=51 // pred_region
                _
              $region92: #{tpu_custom_call.1} parent=51 // pred_fallthru
                _
            $region52: #{tpu_custom_call.1} parent=47 // pred_fallthru
              _
            // Predicated region
            $region53: #{tpu_custom_call.1} parent=47 // pred_check
              _
            $region54: #{tpu_custom_call.1} parent=47 // pred_check_branch
              %532 = sbr.rel target = $region56
            $region55: #{tpu_custom_call.1} parent=47 // pred_region
              %s534 = ssub.s32 256, 1
              %s535 = sshrl.u32 %s521, 2
              // While loop
              $region57: #{tpu_custom_call.1} parent=55 // loop_pre_header
                _
              $region58: #{tpu_custom_call.1} parent=55 // loop_header
                %s537 = sphi 0, %s539
                %p538 = scmp.ge.s32.totalorder %s537, %s535
                %s542 = sphi 0, %s555
                %s543 = sphi %s514, %s558
                %s544 = sphi %s525, %s559
              $region59: #{tpu_custom_call.1} parent=55 // loop_header_branch
                %541 = sbr.rel (%p538) target = $region63
              $region60: #{tpu_custom_call.1} parent=55 // loop_body
                %v545 = vld [vmem:[%s543] sm:%s534]
                %546 = vst [vmem:[%s544] sm:%s534] %v545
                %v547 = vld [vmem:[%s543 + $0x8] sm:%s534]
                %548 = vst [vmem:[%s544 + $0x8] sm:%s534] %v547
                %v549 = vld [vmem:[%s543 + $0x10] sm:%s534]
                %550 = vst [vmem:[%s544 + $0x10] sm:%s534] %v549
                %v551 = vld [vmem:[%s543 + $0x18] sm:%s534]
                %552 = vst [vmem:[%s544 + $0x18] sm:%s534] %v551
                %s553 = sadd.s32 1, %s542
                %p554 = scmp.ge.s32.totalorder %s553, %s535
                %s555 = scalar_select %p554, 0, %s553
                %s556 = smul.u32 %s555, 32
                %s557 = smul.u32 %s555, 32
                %s558 = scalar_lea.vmem %s514, %s556 [#allocation3]
                %s559 = scalar_lea.vmem %s525, %s557
              $region61: #{tpu_custom_call.1} parent=55 // loop_footer
                %s539 = sadd.s32 %s537, 1
              $region62: #{tpu_custom_call.1} parent=55 // loop_footer_branch
                %536 = sbr.rel target = $region58
              $region63: #{tpu_custom_call.1} parent=55 // loop_exit
                _
              %s560 = sshrl.u32 %s521, 2
              %s561 = sand.u32 %s521, 3
              %s562 = smul.u32 %s560, 4
              %s563 = smul.u32 8, %s562
              %s564 = scalar_lea.vmem %s514, %s563 [#allocation3]
              %s565 = smul.u32 8, %s562
              %s566 = scalar_lea.vmem %s525, %s565
              // While loop
              $region64: #{tpu_custom_call.1} parent=55 // loop_pre_header
                _
              $region65: #{tpu_custom_call.1} parent=55 // loop_header
                %s568 = sphi 0, %s570
                %p569 = scmp.ge.s32.totalorder %s568, %s561
                %s573 = sphi 0, %s580
                %s574 = sphi %s564, %s583
                %s575 = sphi %s566, %s584
              $region66: #{tpu_custom_call.1} parent=55 // loop_header_branch
                %572 = sbr.rel (%p569) target = $region70
              $region67: #{tpu_custom_call.1} parent=55 // loop_body
                %v576 = vld [vmem:[%s574] sm:%s534]
                %577 = vst [vmem:[%s575] sm:%s534] %v576
                %s578 = sadd.s32 1, %s573
                %p579 = scmp.ge.s32.totalorder %s578, %s561
                %s580 = scalar_select %p579, 0, %s578
                %s581 = smul.u32 %s580, 8
                %s582 = smul.u32 %s580, 8
                %s583 = scalar_lea.vmem %s564, %s581 [#allocation3]
                %s584 = scalar_lea.vmem %s566, %s582
              $region68: #{tpu_custom_call.1} parent=55 // loop_footer
                %s570 = sadd.s32 %s568, 1
              $region69: #{tpu_custom_call.1} parent=55 // loop_footer_branch
                %567 = sbr.rel target = $region65
              $region70: #{tpu_custom_call.1} parent=55 // loop_exit
                _
            $region56: #{tpu_custom_call.1} parent=47 // pred_fallthru
              _
          $region48: #{tpu_custom_call.1} parent=43 // pred_fallthru
            _
          %639 = vnop
        $region44: #{tpu_custom_call.1} parent=39 // pred_fallthru
          _
      $region40: #{tpu_custom_call.1} parent=5 // pred_fallthru
        _
      %p640 = scmp.le.s32.totalorder 2, %s13
      // Predicated region
      $region93: #{tpu_custom_call.1} parent=5 // pred_check
        %p641 = pneg %p640
      $region94: #{tpu_custom_call.1} parent=5 // pred_check_branch
        %643 = sbr.rel (%p641) target = $region96
      $region95: #{tpu_custom_call.1} parent=5 // pred_region
        %s644 = ssub.s32 %s13, 2
        // Predicated region
        $region97: #{tpu_custom_call.1} parent=95 // pred_check
          %p645 = pneg %p152
        $region98: #{tpu_custom_call.1} parent=95 // pred_check_branch
          %647 = sbr.rel (%p645) target = $region100
        $region99: #{tpu_custom_call.1} parent=95 // pred_region
          %s648 = sand.u32 %s137, 1
          %s649 = sand.u32 %s137, 1
          %s650 = smul.addr %s649, 32
          %s651 = scalar_lea.vmem [#allocation3], %s650
        $region100: #{tpu_custom_call.1} parent=95 // pred_fallthru
          _
      $region96: #{tpu_custom_call.1} parent=5 // pred_fallthru
        _
    $region6: #{tpu_custom_call.1} parent=1 // loop_footer
      %s17 = sadd.s32 1, %s13
    $region7: #{tpu_custom_call.1} parent=1 // loop_footer_branch
      %12 = sbr.rel target = $region3
    $region8: #{tpu_custom_call.1} parent=1 // loop_exit
      _

</llo_original>
